<compile_context>
chip_gen: v5e
topology: v5e:2x2
jax: 0.10.0
libtpu: 0.0.40
codegen_flags: <defaults>
</compile_context>

<pallas_src>
import functools

import jax
import jax.numpy as jnp
from jax.experimental import pallas as pl
from jax.experimental.pallas import tpu as pltpu


# ---------------------------------------------------------------------------
# Kernels
# ---------------------------------------------------------------------------
def _layer_kernel_single_k(x_ref, w_ref, *rest, fuse_bn_relu):
    """Whole-K variant (2-D grid): out = epilogue(x @ w). No scratch accumulator."""
    z = jnp.dot(x_ref[...], w_ref[...], preferred_element_type=jnp.float32)
    if fuse_bn_relu:
        scale_ref, shift_ref, o_ref = rest
        z = jnp.maximum(z * scale_ref[...] + shift_ref[...], 0.0)
    else:
        b_ref, o_ref = rest
        z = z + b_ref[...]
    o_ref[...] = z.astype(o_ref.dtype)


def _layer_kernel_multi_k(x_ref, w_ref, *rest, fuse_bn_relu):
    """K-tiled variant (3-D grid, reduction last): f32 VMEM accumulator + fused epilogue."""
    if fuse_bn_relu:
        scale_ref, shift_ref, o_ref, acc_ref = rest
    else:
        b_ref, o_ref, acc_ref = rest

    k = pl.program_id(2)

    @pl.when(k == 0)
    def _():
        acc_ref[...] = jnp.zeros_like(acc_ref)

    acc_ref[...] += jnp.dot(
        x_ref[...], w_ref[...], preferred_element_type=jnp.float32
    )

    @pl.when(k == pl.num_programs(2) - 1)
    def _():
        z = acc_ref[...]
        if fuse_bn_relu:
            z = jnp.maximum(z * scale_ref[...] + shift_ref[...], 0.0)
        else:
            z = z + b_ref[...]
        o_ref[...] = z.astype(o_ref.dtype)


# ---------------------------------------------------------------------------
# Wrappers
# ---------------------------------------------------------------------------
def _pick_tile(dim, candidates=(512, 256, 128)):
    """Largest MXU-friendly tile that evenly divides `dim`, else the full extent
    (a full-extent block is always a legal BlockSpec)."""
    for c in candidates:
        if dim >= c and dim % c == 0:
            return c
    return dim


def fused_linear(x, w, b=None, scale=None, shift=None):
    """One MLP layer.

    x: (M, K) f32, w: (K, N) f32.
    If scale/shift are given:  y = relu((x @ w) * scale + shift)
        (bias must already be folded into `shift` by the caller)
    else:                      y = (x @ w) + b
    """
    M, K = x.shape
    Kw, N = w.shape
    assert K == Kw, (K, Kw)

    tm, tn, tk = _pick_tile(M), _pick_tile(N), _pick_tile(K)
    fuse_bn_relu = scale is not None

    if fuse_bn_relu:
        vec_args = [scale.reshape(1, N).astype(jnp.float32),
                    shift.reshape(1, N).astype(jnp.float32)]
    else:
        vec_args = [b.reshape(1, N).astype(jnp.float32)]

    n_vec = len(vec_args)
    bytes_accessed = 4 * (x.size + w.size + M * N + n_vec * N)
    cost = pl.CostEstimate(flops=2 * M * K * N, transcendentals=0,
                           bytes_accessed=bytes_accessed)

    if tk == K:
        # Single K tile: 2-D grid, no accumulator scratch, no init/finalize gates.
        grid = (M // tm, N // tn)
        vec_spec = pl.BlockSpec((1, tn), lambda i, j: (0, j))
        in_specs = [pl.BlockSpec((tm, K), lambda i, j: (i, 0)),   # activations
                    pl.BlockSpec((K, tn), lambda i, j: (0, j))]   # weights
        in_specs += [vec_spec] * n_vec
        out_spec = pl.BlockSpec((tm, tn), lambda i, j: (i, j))
        kernel = functools.partial(_layer_kernel_single_k, fuse_bn_relu=fuse_bn_relu)
        scratch_shapes = []
        dim_sem = ("parallel", "parallel")
    else:
        # K-tiled: 3-D grid, reduction axis last, f32 VMEM accumulator.
        grid = (M // tm, N // tn, K // tk)
        vec_spec = pl.BlockSpec((1, tn), lambda i, j, k: (0, j))
        in_specs = [pl.BlockSpec((tm, tk), lambda i, j, k: (i, k)),   # activations
                    pl.BlockSpec((tk, tn), lambda i, j, k: (k, j))]   # weights
        in_specs += [vec_spec] * n_vec
        out_spec = pl.BlockSpec((tm, tn), lambda i, j, k: (i, j))
        kernel = functools.partial(_layer_kernel_multi_k, fuse_bn_relu=fuse_bn_relu)
        scratch_shapes = [pltpu.VMEM((tm, tn), jnp.float32)]
        dim_sem = ("parallel", "parallel", "arbitrary")

    return pl.pallas_call(
        kernel,
        out_shape=jax.ShapeDtypeStruct((M, N), x.dtype),
        grid_spec=pltpu.PrefetchScalarGridSpec(
            num_scalar_prefetch=0,
            grid=grid,
            in_specs=in_specs,
            out_specs=out_spec,
            scratch_shapes=scratch_shapes,
        ),
        compiler_params=pltpu.CompilerParams(dimension_semantics=dim_sem),
        cost_estimate=cost,
    )(x, w, *vec_args)


def mlp_forward(x, weights, biases, bn_scales, bn_shifts, *, residual=False):
    """Eval-mode forward of the PyTorch MLP.

    weights[i]: (fan_in, fan_out)  (already transposed vs. torch's (out, in))
    biases[i]:  (fan_out,)
    bn_scales[i] / bn_shifts[i]: folded BatchNorm1d eval params for hidden layers
        scale = gamma / sqrt(running_var + eps);  shift = beta - running_mean * scale
    """
    n_layers = len(weights)
    prev_x = x if residual else None
    for i in range(n_layers):
        if i < n_layers - 1:
            s = bn_scales[i]
            # Fold the linear bias into the BatchNorm shift (one fewer vector add in-kernel).
            sh = bn_shifts[i] + biases[i] * s
            x = fused_linear(x, weights[i], scale=s, shift=sh)
        else:
            x = fused_linear(x, weights[i], b=biases[i])
        if residual:
            if x.shape[1] == prev_x.shape[1]:
                x = x + prev_x
            prev_x = x
    return x


# ---------------------------------------------------------------------------
# Demo / self-check
# ---------------------------------------------------------------------------
if __name__ == "__main__":
    # Small but TPU-aligned config: lane dims multiples of 128, rows multiple of 8.
    batch, in_feats, hidden, out_feats, n_layers = 256, 128, 256, 128, 3
    eps = 1e-5

    key = jax.random.PRNGKey(0)
    kx, *kp = jax.random.split(key, 1 + 4 * n_layers)

    x = jax.random.normal(kx, (batch, in_feats), dtype=jnp.float32)

    dims = [in_feats] + [hidden] * (n_layers - 1) + [out_feats]
    weights, biases, bn_scales, bn_shifts = [], [], [], []
    gain = 2.0 ** 0.5  # relu gain, as in reset_parameters()
    for i in range(n_layers):
        fan_in, fan_out = dims[i], dims[i + 1]
        bound = gain * (6.0 / (fan_in + fan_out)) ** 0.5  # xavier_uniform_
        w = jax.random.uniform(
            kp[4 * i], (fan_in, fan_out), jnp.float32, minval=-bound, maxval=bound
        )
        b = 0.01 * jax.random.normal(kp[4 * i + 1], (fan_out,), jnp.float32)
        weights.append(w)
        biases.append(b)
        if i < n_layers - 1:
            # Deterministic non-trivial eval-mode BatchNorm statistics/affine params.
            gamma = 1.0 + 0.1 * jax.random.normal(kp[4 * i + 2], (fan_out,), jnp.float32)
            beta = 0.1 * jax.random.normal(kp[4 * i + 3], (fan_out,), jnp.float32)
            mean = 0.1 * jax.random.normal(kp[4 * i], (fan_out,), jnp.float32)
            var = jnp.ones((fan_out,), jnp.float32) + 0.05
            scale = gamma / jnp.sqrt(var + eps)
            shift = beta - mean * scale
            bn_scales.append(scale)
            bn_shifts.append(shift)

    out = mlp_forward(x, weights, biases, bn_scales, bn_shifts, residual=False)
    out = jax.block_until_ready(out)

    # Pure-JAX reference of the eval-mode forward (dropout = identity).
    ref = x
    for i in range(n_layers):
        ref = ref @ weights[i] + biases[i]
        if i < n_layers - 1:
            ref = ref * bn_scales[i] + bn_shifts[i]
            ref = jnp.maximum(ref, 0.0)

    assert out.shape == (batch, out_feats)
    assert jnp.allclose(out, ref, atol=1e-4, rtol=1e-4), float(
        jnp.max(jnp.abs(out - ref))
    )

    print("KERNEL_OK")
</pallas_src>

<mosaic_0001>
module attributes {stable_mosaic.version = 11 : i64} {
  func.func @_layer_kernel_single_k(%arg0: i32, %arg1: i32, %arg2: memref<256x128xf32, #tpu.memory_space<vmem>>, %arg3: memref<128x256xf32, #tpu.memory_space<vmem>>, %arg4: memref<1x256xf32, #tpu.memory_space<vmem>>, %arg5: memref<1x256xf32, #tpu.memory_space<vmem>>, %arg6: memref<256x256xf32, #tpu.memory_space<vmem>>) attributes {dimension_semantics = [#tpu.dimension_semantics<parallel>, #tpu.dimension_semantics<parallel>], iteration_bounds = array<i64: 1, 1>, scalar_prefetch = 0 : i64, scratch_operands = 0 : i64, tpu.core_type = #tpu.core_type<tc>, window_params = [{transform_indices = @transform_0, window_bounds = array<i64: 256, 128>}, {transform_indices = @transform_1, window_bounds = array<i64: 128, 256>}, {transform_indices = @transform_2, window_bounds = array<i64: 1, 256>}, {transform_indices = @transform_3, window_bounds = array<i64: 1, 256>}, {transform_indices = @transform_4, window_bounds = array<i64: 256, 256>}]} {
    %c0 = arith.constant 0 : index
    %c0_0 = arith.constant 0 : index
    %0 = vector.load %arg2[%c0, %c0_0] : memref<256x128xf32, #tpu.memory_space<vmem>>, vector<256x128xf32>
    %c0_1 = arith.constant 0 : index
    %c0_2 = arith.constant 0 : index
    %1 = vector.load %arg3[%c0_1, %c0_2] : memref<128x256xf32, #tpu.memory_space<vmem>>, vector<128x256xf32>
    %cst = arith.constant dense<0.000000e+00> : vector<256x256xf32>
    %2 = tpu.matmul %0, %1, %cst {dimension_numbers = #tpu.dot_dimension_numbers<[1], [0], [0], [1], [0, 0, 1, 1], [], []>} : vector<256x128xf32>, vector<128x256xf32>, vector<256x256xf32> -> vector<256x256xf32>
    %c0_3 = arith.constant 0 : index
    %c0_4 = arith.constant 0 : index
    %3 = vector.load %arg4[%c0_3, %c0_4] : memref<1x256xf32, #tpu.memory_space<vmem>>, vector<1x256xf32>
    %4 = vector.broadcast %3 : vector<1x256xf32> to vector<256x256xf32>
    %5 = arith.mulf %2, %4 : vector<256x256xf32>
    %c0_5 = arith.constant 0 : index
    %c0_6 = arith.constant 0 : index
    %6 = vector.load %arg5[%c0_5, %c0_6] : memref<1x256xf32, #tpu.memory_space<vmem>>, vector<1x256xf32>
    %7 = vector.broadcast %6 : vector<1x256xf32> to vector<256x256xf32>
    %8 = arith.addf %5, %7 : vector<256x256xf32>
    %cst_7 = arith.constant 0.000000e+00 : f32
    %9 = vector.broadcast %cst_7 : f32 to vector<256x256xf32>
    %10 = arith.maximumf %8, %9 : vector<256x256xf32>
    %c0_8 = arith.constant 0 : index
    %c0_9 = arith.constant 0 : index
    %11 = vector.load %arg6[%c0_8, %c0_9] : memref<256x256xf32, #tpu.memory_space<vmem>>, vector<256x256xf32>
    tpu.vector_store %arg6[%c0_8, %c0_9], %10 {strides = array<i32>} : memref<256x256xf32, #tpu.memory_space<vmem>>, vector<256x256xf32>,
    return
  }
  func.func @transform_0(%arg0: i32, %arg1: i32) -> (i32, i32) {
    %c0_i32 = arith.constant 0 : i32
    %c0_i32_0 = arith.constant 0 : i32
    return %arg0, %c0_i32 : i32, i32
  }
  func.func @transform_1(%arg0: i32, %arg1: i32) -> (i32, i32) {
    %c0_i32 = arith.constant 0 : i32
    %c0_i32_0 = arith.constant 0 : i32
    return %c0_i32, %arg1 : i32, i32
  }
  func.func @transform_2(%arg0: i32, %arg1: i32) -> (i32, i32) {
    %c0_i32 = arith.constant 0 : i32
    %c0_i32_0 = arith.constant 0 : i32
    return %c0_i32, %arg1 : i32, i32
  }
  func.func @transform_3(%arg0: i32, %arg1: i32) -> (i32, i32) {
    %c0_i32 = arith.constant 0 : i32
    %c0_i32_0 = arith.constant 0 : i32
    return %c0_i32, %arg1 : i32, i32
  }
  func.func @transform_4(%arg0: i32, %arg1: i32) -> (i32, i32) {
    %c0_i32 = arith.constant 0 : i32
    return %arg0, %arg1 : i32, i32
  }
}

</mosaic_0001>

<llo_original>
// kernel: tpu_custom_call.1
$region0: #{tpu_custom_call.1}
  #allocation0 [shape = 'u32[]', space=smem, size = 0x4, offset = 0x4, fixed_abs, tag = 'smem constant byte address 0x4 - core index']
  #allocation1 [shape = 'u32[72,128]{1,0:T(1,128)}', space=vmem, size = 0x9000, scoped, tag = 'internal scratch']
  %s0 = inlined_call_operand.hbm [shape: f32[256,128], index: 0, kind: input, shape index: {}]
  %s1 = inlined_call_operand.hbm [shape: f32[128,256], index: 1, kind: input, shape index: {}]
  %s2 = inlined_call_operand.hbm [shape: f32[1,256], index: 2, kind: input, shape index: {}]
  %s3 = inlined_call_operand.vmem [shape: f32[1,256], index: 3, kind: input, shape index: {}]
  %s4 = inlined_call_operand.hbm [shape: f32[256,256], index: 4, kind: output, shape index: {}]
  %s5 = sld [smem:[#allocation0]]
  $region38: #{tpu_custom_call.1} parent=0
    _
  %s7 = ssub.s32 1, %s5
  %s8 = scalar_select 0, %s7, %s5
  $region1: #{tpu_custom_call.1} parent=0
    #allocation2 [shape = 'u8[131072]{0}', space=vmem, size = 0x20000, scoped, tag = 'input window, operand 0, single buffered']
    #allocation3 [shape = 's32[1]{0}', space=sflag, size = 0x4, scoped, tag = 'scoped memory for tpu_custom_call.1']
    #allocation4 [shape = 's32[1]{0}', space=sflag, size = 0x4, scoped, tag = 'scoped memory for tpu_custom_call.1']
    #allocation5 [shape = 'u8[131072]{0}', space=vmem, size = 0x20000, scoped, tag = 'input window, operand 1, single buffered']
    #allocation6 [shape = 's32[1]{0}', space=sflag, size = 0x4, scoped, tag = 'scoped memory for tpu_custom_call.1']
    #allocation7 [shape = 'u8[1024]{0}', space=vmem, size = 0x400, scoped, tag = 'input window, operand 2, single buffered']
    #allocation8 [shape = 'u8[262144]{0}', space=vmem, size = 0x40000, scoped, tag = 'output window, operand 0, single buffered']
    %9 = vsyncpa [#allocation3], 0
    %10 = vsyncpa [#allocation6], 0
    %11 = vsyncpa [#allocation4], 0
    // Predicated region
    $region2: #{tpu_custom_call.1} parent=1 // pred_check
      _
    $region3: #{tpu_custom_call.1} parent=1 // pred_check_branch
      %13 = sbr.rel (0) target = $region5
    $region4: #{tpu_custom_call.1} parent=1 // pred_region
      %15 = vsyncadd [#allocation3], 0
      %s16 = sshll.u32 %s0, 4
      %s17 = int_to_ptr.hbm [resolvable:$true] %s16
      %s18 = sshll.u32 [#allocation2], 4
      %s19 = int_to_ptr.vmem [resolvable:$true] %s18
      %24 = dma.hbm_to_vmem [thread:$0]  %s17, 4096, %s19, [#allocation3], 128, 128, 8
    $region5: #{tpu_custom_call.1} parent=1 // pred_fallthru
      _
    // Predicated region
    $region6: #{tpu_custom_call.1} parent=1 // pred_check
      _
    $region7: #{tpu_custom_call.1} parent=1 // pred_check_branch
      %26 = sbr.rel (0) target = $region9
    $region8: #{tpu_custom_call.1} parent=1 // pred_region
      %28 = vsyncadd [#allocation6], 0
      %s29 = sshll.u32 %s1, 4
      %s30 = int_to_ptr.hbm [resolvable:$true] %s29
      %s31 = sshll.u32 [#allocation5], 4
      %s32 = int_to_ptr.vmem [resolvable:$true] %s31
      %37 = dma.hbm_to_vmem [thread:$0]  %s30, 4096, %s32, [#allocation6], 256, 256, 16
    $region9: #{tpu_custom_call.1} parent=1 // pred_fallthru
      _
    // Predicated region
    $region10: #{tpu_custom_call.1} parent=1 // pred_check
      _
    $region11: #{tpu_custom_call.1} parent=1 // pred_check_branch
      %39 = sbr.rel (0) target = $region13
    $region12: #{tpu_custom_call.1} parent=1 // pred_region
      %41 = vsyncadd [#allocation6], 0
      %s43 = sshll.u32 %s2, 4
      %s44 = int_to_ptr.hbm [resolvable:$true] %s43
      %s45 = sshll.u32 [#allocation7], 4
      %s46 = int_to_ptr.vmem [resolvable:$true] %s45
      %48 = dma.hbm_to_vmem [thread:$0]  %s44, 32, %s46, [#allocation6]
    $region13: #{tpu_custom_call.1} parent=1 // pred_fallthru
      _
    // Predicated region
    $region14: #{tpu_custom_call.1} parent=1 // pred_check
      _
    $region15: #{tpu_custom_call.1} parent=1 // pred_check_branch
      %50 = sbr.rel (0) target = $region17
    $region16: #{tpu_custom_call.1} parent=1 // pred_region
      _
    $region17: #{tpu_custom_call.1} parent=1 // pred_fallthru
      _
    // Predicated region
    $region18: #{tpu_custom_call.1} parent=1 // pred_check
      _
    $region19: #{tpu_custom_call.1} parent=1 // pred_check_branch
      %52 = sbr.rel (0) target = $region21
    $region20: #{tpu_custom_call.1} parent=1 // pred_region
      %54 = dma.done [#allocation3], 4096
    $region21: #{tpu_custom_call.1} parent=1 // pred_fallthru
      _
    // Predicated region
    $region22: #{tpu_custom_call.1} parent=1 // pred_check
      _
    $region23: #{tpu_custom_call.1} parent=1 // pred_check_branch
      %56 = sbr.rel (0) target = $region25
    $region24: #{tpu_custom_call.1} parent=1 // pred_region
      %58 = dma.done [#allocation6], 4096
    $region25: #{tpu_custom_call.1} parent=1 // pred_fallthru
      _
    // Predicated region
    $region26: #{tpu_custom_call.1} parent=1 // pred_check
      _
    $region27: #{tpu_custom_call.1} parent=1 // pred_check_branch
      %60 = sbr.rel (0) target = $region29
    $region28: #{tpu_custom_call.1} parent=1 // pred_region
      %62 = dma.done [#allocation6], 32
    $region29: #{tpu_custom_call.1} parent=1 // pred_fallthru
      _
    %v63 = vld [vmem:[#allocation2] sm:$0xff]
    %v64 = vld [vmem:[#allocation2 + $0x8] sm:$0xff]
    %v65 = vld [vmem:[#allocation2 + $0x10] sm:$0xff]
    %v66 = vld [vmem:[#allocation2 + $0x18] sm:$0xff]
    %v67 = vld [vmem:[#allocation2 + $0x20] sm:$0xff]
    %v68 = vld [vmem:[#allocation2 + $0x28] sm:$0xff]
    %v69 = vld [vmem:[#allocation2 + $0x30] sm:$0xff]
    %v70 = vld [vmem:[#allocation2 + $0x38] sm:$0xff]
    %v71 = vld [vmem:[#allocation2 + $0x40] sm:$0xff]
    %v72 = vld [vmem:[#allocation2 + $0x48] sm:$0xff]
    %v73 = vld [vmem:[#allocation2 + $0x50] sm:$0xff]
    %v74 = vld [vmem:[#allocation2 + $0x58] sm:$0xff]
    %v75 = vld [vmem:[#allocation2 + $0x60] sm:$0xff]
    %v76 = vld [vmem:[#allocation2 + $0x68] sm:$0xff]
    %v77 = vld [vmem:[#allocation2 + $0x70] sm:$0xff]
    %v78 = vld [vmem:[#allocation2 + $0x78] sm:$0xff]
    %v79 = vld [vmem:[#allocation2 + $0x80] sm:$0xff]
    %v80 = vld [vmem:[#allocation2 + $0x88] sm:$0xff]
    %v81 = vld [vmem:[#allocation2 + $0x90] sm:$0xff]
    %v82 = vld [vmem:[#allocation2 + $0x98] sm:$0xff]
    %v83 = vld [vmem:[#allocation2 + $0xa0] sm:$0xff]
    %v84 = vld [vmem:[#allocation2 + $0xa8] sm:$0xff]
    %v85 = vld [vmem:[#allocation2 + $0xb0] sm:$0xff]
    %v86 = vld [vmem:[#allocation2 + $0xb8] sm:$0xff]
    %v87 = vld [vmem:[#allocation2 + $0xc0] sm:$0xff]
    %v88 = vld [vmem:[#allocation2 + $0xc8] sm:$0xff]
    %v89 = vld [vmem:[#allocation2 + $0xd0] sm:$0xff]
    %v90 = vld [vmem:[#allocation2 + $0xd8] sm:$0xff]
    %v91 = vld [vmem:[#allocation2 + $0xe0] sm:$0xff]
    %v92 = vld [vmem:[#allocation2 + $0xe8] sm:$0xff]
    %v93 = vld [vmem:[#allocation2 + $0xf0] sm:$0xff]
    %v94 = vld [vmem:[#allocation2 + $0xf8] sm:$0xff]
    %v95 = vld [vmem:[#allocation5] sm:$0xff]
    %v96 = vld [vmem:[#allocation5 + $0x8] sm:$0xff]
    %v97 = vld [vmem:[#allocation5 + $0x10] sm:$0xff]
    %v98 = vld [vmem:[#allocation5 + $0x18] sm:$0xff]
    %v99 = vld [vmem:[#allocation5 + $0x20] sm:$0xff]
    %v100 = vld [vmem:[#allocation5 + $0x28] sm:$0xff]
    %v101 = vld [vmem:[#allocation5 + $0x30] sm:$0xff]
    %v102 = vld [vmem:[#allocation5 + $0x38] sm:$0xff]
    %v103 = vld [vmem:[#allocation5 + $0x40] sm:$0xff]
    %v104 = vld [vmem:[#allocation5 + $0x48] sm:$0xff]
    %v105 = vld [vmem:[#allocation5 + $0x50] sm:$0xff]
    %v106 = vld [vmem:[#allocation5 + $0x58] sm:$0xff]
    %v107 = vld [vmem:[#allocation5 + $0x60] sm:$0xff]
    %v108 = vld [vmem:[#allocation5 + $0x68] sm:$0xff]
    %v109 = vld [vmem:[#allocation5 + $0x70] sm:$0xff]
    %v110 = vld [vmem:[#allocation5 + $0x78] sm:$0xff]
    %v111 = vld [vmem:[#allocation5 + $0x80] sm:$0xff]
    %v112 = vld [vmem:[#allocation5 + $0x88] sm:$0xff]
    %v113 = vld [vmem:[#allocation5 + $0x90] sm:$0xff]
    %v114 = vld [vmem:[#allocation5 + $0x98] sm:$0xff]
    %v115 = vld [vmem:[#allocation5 + $0xa0] sm:$0xff]
    %v116 = vld [vmem:[#allocation5 + $0xa8] sm:$0xff]
    %v117 = vld [vmem:[#allocation5 + $0xb0] sm:$0xff]
    %v118 = vld [vmem:[#allocation5 + $0xb8] sm:$0xff]
    %v119 = vld [vmem:[#allocation5 + $0xc0] sm:$0xff]
    %v120 = vld [vmem:[#allocation5 + $0xc8] sm:$0xff]
    %v121 = vld [vmem:[#allocation5 + $0xd0] sm:$0xff]
    %v122 = vld [vmem:[#allocation5 + $0xd8] sm:$0xff]
    %v123 = vld [vmem:[#allocation5 + $0xe0] sm:$0xff]
    %v124 = vld [vmem:[#allocation5 + $0xe8] sm:$0xff]
    %v125 = vld [vmem:[#allocation5 + $0xf0] sm:$0xff]
    %v126 = vld [vmem:[#allocation5 + $0xf8] sm:$0xff]
    %127 = vmatpush.msra.mxu0 %v125
    %128 = vmatpush.msra.mxu0 %v123
    %129 = vmatpush.msra.mxu0 %v121
    %130 = vmatpush.msra.mxu0 %v119
    %131 = vmatpush.msra.mxu0 %v117
    %132 = vmatpush.msra.mxu0 %v115
    %133 = vmatpush.msra.mxu0 %v113
    %134 = vmatpush.msra.mxu0 %v111
    %135 = vmatpush.msra.mxu0 %v109
    %136 = vmatpush.msra.mxu0 %v107
    %137 = vmatpush.msra.mxu0 %v105
    %138 = vmatpush.msra.mxu0 %v103
    %139 = vmatpush.msra.mxu0 %v101
    %140 = vmatpush.msra.mxu0 %v99
    %141 = vmatpush.msra.mxu0 %v97
    %142 = vmatpush.msra.mxu0 %v95
    %143 = vmatmul.f32.gmra.mxu0 %v63
    %v144 = vpop.f32.mrf.mxu0
    %v145 = vadd.f32 0.0, %v144
    %146 = vmatmul.f32.gmra.mxu0 %v64
    %v147 = vpop.f32.mrf.mxu0
    %v148 = vadd.f32 0.0, %v147
    %149 = vmatmul.f32.gmra.mxu0 %v65
    %v150 = vpop.f32.mrf.mxu0
    %v151 = vadd.f32 0.0, %v150
    %152 = vmatmul.f32.gmra.mxu0 %v66
    %v153 = vpop.f32.mrf.mxu0
    %v154 = vadd.f32 0.0, %v153
    %155 = vmatmul.f32.gmra.mxu0 %v67
    %v156 = vpop.f32.mrf.mxu0
    %v157 = vadd.f32 0.0, %v156
    %158 = vmatmul.f32.gmra.mxu0 %v68
    %v159 = vpop.f32.mrf.mxu0
    %v160 = vadd.f32 0.0, %v159
    %161 = vmatmul.f32.gmra.mxu0 %v69
    %v162 = vpop.f32.mrf.mxu0
    %v163 = vadd.f32 0.0, %v162
    %164 = vmatmul.f32.gmra.mxu0 %v70
    %v165 = vpop.f32.mrf.mxu0
    %v166 = vadd.f32 0.0, %v165
    %167 = vmatmul.f32.gmra.mxu0 %v71
    %v168 = vpop.f32.mrf.mxu0
    %v169 = vadd.f32 0.0, %v168
    %170 = vmatmul.f32.gmra.mxu0 %v72
    %v171 = vpop.f32.mrf.mxu0
    %v172 = vadd.f32 0.0, %v171
    %173 = vmatmul.f32.gmra.mxu0 %v73
    %v174 = vpop.f32.mrf.mxu0
    %v175 = vadd.f32 0.0, %v174
    %176 = vmatmul.f32.gmra.mxu0 %v74
    %v177 = vpop.f32.mrf.mxu0
    %v178 = vadd.f32 0.0, %v177
    %179 = vmatmul.f32.gmra.mxu0 %v75
    %v180 = vpop.f32.mrf.mxu0
    %v181 = vadd.f32 0.0, %v180
    %182 = vmatmul.f32.gmra.mxu0 %v76
    %v183 = vpop.f32.mrf.mxu0
    %v184 = vadd.f32 0.0, %v183
    %185 = vmatmul.f32.gmra.mxu0 %v77
    %v186 = vpop.f32.mrf.mxu0
    %v187 = vadd.f32 0.0, %v186
    %188 = vmatmul.f32.gmra.mxu0 %v78
    %v189 = vpop.f32.mrf.mxu0
    %v190 = vadd.f32 0.0, %v189
    %191 = vmatmul.f32.gmra.mxu0 %v79
    %v192 = vpop.f32.mrf.mxu0
    %v193 = vadd.f32 0.0, %v192
    %194 = vmatmul.f32.gmra.mxu0 %v80
    %v195 = vpop.f32.mrf.mxu0
    %v196 = vadd.f32 0.0, %v195
    %197 = vmatmul.f32.gmra.mxu0 %v81
    %v198 = vpop.f32.mrf.mxu0
    %v199 = vadd.f32 0.0, %v198
    %200 = vmatmul.f32.gmra.mxu0 %v82
    %v201 = vpop.f32.mrf.mxu0
    %v202 = vadd.f32 0.0, %v201
    %203 = vmatmul.f32.gmra.mxu0 %v83
    %v204 = vpop.f32.mrf.mxu0
    %v205 = vadd.f32 0.0, %v204
    %206 = vmatmul.f32.gmra.mxu0 %v84
    %v207 = vpop.f32.mrf.mxu0
    %v208 = vadd.f32 0.0, %v207
    %209 = vmatmul.f32.gmra.mxu0 %v85
    %v210 = vpop.f32.mrf.mxu0
    %v211 = vadd.f32 0.0, %v210
    %212 = vmatmul.f32.gmra.mxu0 %v86
    %v213 = vpop.f32.mrf.mxu0
    %v214 = vadd.f32 0.0, %v213
    %215 = vmatmul.f32.gmra.mxu0 %v87
    %v216 = vpop.f32.mrf.mxu0
    %v217 = vadd.f32 0.0, %v216
    %218 = vmatmul.f32.gmra.mxu0 %v88
    %v219 = vpop.f32.mrf.mxu0
    %v220 = vadd.f32 0.0, %v219
    %221 = vmatmul.f32.gmra.mxu0 %v89
    %v222 = vpop.f32.mrf.mxu0
    %v223 = vadd.f32 0.0, %v222
    %224 = vmatmul.f32.gmra.mxu0 %v90
    %v225 = vpop.f32.mrf.mxu0
    %v226 = vadd.f32 0.0, %v225
    %227 = vmatmul.f32.gmra.mxu0 %v91
    %v228 = vpop.f32.mrf.mxu0
    %v229 = vadd.f32 0.0, %v228
    %230 = vmatmul.f32.gmra.mxu0 %v92
    %v231 = vpop.f32.mrf.mxu0
    %v232 = vadd.f32 0.0, %v231
    %233 = vmatmul.f32.gmra.mxu0 %v93
    %v234 = vpop.f32.mrf.mxu0
    %v235 = vadd.f32 0.0, %v234
    %236 = vmatmul.f32.gmra.mxu0 %v94
    %v237 = vpop.f32.mrf.mxu0
    %v238 = vadd.f32 0.0, %v237
    %239 = vdwg.mxu0
    %240 = vmatpush.msra.mxu0 %v126
    %241 = vmatpush.msra.mxu0 %v124
    %242 = vmatpush.msra.mxu0 %v122
    %243 = vmatpush.msra.mxu0 %v120
    %244 = vmatpush.msra.mxu0 %v118
    %245 = vmatpush.msra.mxu0 %v116
    %246 = vmatpush.msra.mxu0 %v114
    %247 = vmatpush.msra.mxu0 %v112
    %248 = vmatpush.msra.mxu0 %v110
    %249 = vmatpush.msra.mxu0 %v108
    %250 = vmatpush.msra.mxu0 %v106
    %251 = vmatpush.msra.mxu0 %v104
    %252 = vmatpush.msra.mxu0 %v102
    %253 = vmatpush.msra.mxu0 %v100
    %254 = vmatpush.msra.mxu0 %v98
    %255 = vmatpush.msra.mxu0 %v96
    %256 = vmatmul.f32.gmra.mxu0 %v63
    %v257 = vpop.f32.mrf.mxu0
    %v258 = vadd.f32 0.0, %v257
    %259 = vmatmul.f32.gmra.mxu0 %v64
    %v260 = vpop.f32.mrf.mxu0
    %v261 = vadd.f32 0.0, %v260
    %262 = vmatmul.f32.gmra.mxu0 %v65
    %v263 = vpop.f32.mrf.mxu0
    %v264 = vadd.f32 0.0, %v263
    %265 = vmatmul.f32.gmra.mxu0 %v66
    %v266 = vpop.f32.mrf.mxu0
    %v267 = vadd.f32 0.0, %v266
    %268 = vmatmul.f32.gmra.mxu0 %v67
    %v269 = vpop.f32.mrf.mxu0
    %v270 = vadd.f32 0.0, %v269
    %271 = vmatmul.f32.gmra.mxu0 %v68
    %v272 = vpop.f32.mrf.mxu0
    %v273 = vadd.f32 0.0, %v272
    %274 = vmatmul.f32.gmra.mxu0 %v69
    %v275 = vpop.f32.mrf.mxu0
    %v276 = vadd.f32 0.0, %v275
    %277 = vmatmul.f32.gmra.mxu0 %v70
    %v278 = vpop.f32.mrf.mxu0
    %v279 = vadd.f32 0.0, %v278
    %280 = vmatmul.f32.gmra.mxu0 %v71
    %v281 = vpop.f32.mrf.mxu0
    %v282 = vadd.f32 0.0, %v281
    %283 = vmatmul.f32.gmra.mxu0 %v72
    %v284 = vpop.f32.mrf.mxu0
    %v285 = vadd.f32 0.0, %v284
    %286 = vmatmul.f32.gmra.mxu0 %v73
    %v287 = vpop.f32.mrf.mxu0
    %v288 = vadd.f32 0.0, %v287
    %289 = vmatmul.f32.gmra.mxu0 %v74
    %v290 = vpop.f32.mrf.mxu0
    %v291 = vadd.f32 0.0, %v290
    %292 = vmatmul.f32.gmra.mxu0 %v75
    %v293 = vpop.f32.mrf.mxu0
    %v294 = vadd.f32 0.0, %v293
    %295 = vmatmul.f32.gmra.mxu0 %v76
    %v296 = vpop.f32.mrf.mxu0
    %v297 = vadd.f32 0.0, %v296
    %298 = vmatmul.f32.gmra.mxu0 %v77
    %v299 = vpop.f32.mrf.mxu0
    %v300 = vadd.f32 0.0, %v299
    %301 = vmatmul.f32.gmra.mxu0 %v78
    %v302 = vpop.f32.mrf.mxu0
    %v303 = vadd.f32 0.0, %v302
    %304 = vmatmul.f32.gmra.mxu0 %v79
    %v305 = vpop.f32.mrf.mxu0
    %v306 = vadd.f32 0.0, %v305
    %307 = vmatmul.f32.gmra.mxu0 %v80
    %v308 = vpop.f32.mrf.mxu0
    %v309 = vadd.f32 0.0, %v308
    %310 = vmatmul.f32.gmra.mxu0 %v81
    %v311 = vpop.f32.mrf.mxu0
    %v312 = vadd.f32 0.0, %v311
    %313 = vmatmul.f32.gmra.mxu0 %v82
    %v314 = vpop.f32.mrf.mxu0
    %v315 = vadd.f32 0.0, %v314
    %316 = vmatmul.f32.gmra.mxu0 %v83
    %v317 = vpop.f32.mrf.mxu0
    %v318 = vadd.f32 0.0, %v317
    %319 = vmatmul.f32.gmra.mxu0 %v84
    %v320 = vpop.f32.mrf.mxu0
    %v321 = vadd.f32 0.0, %v320
    %322 = vmatmul.f32.gmra.mxu0 %v85
    %v323 = vpop.f32.mrf.mxu0
    %v324 = vadd.f32 0.0, %v323
    %325 = vmatmul.f32.gmra.mxu0 %v86
    %v326 = vpop.f32.mrf.mxu0
    %v327 = vadd.f32 0.0, %v326
    %328 = vmatmul.f32.gmra.mxu0 %v87
    %v329 = vpop.f32.mrf.mxu0
    %v330 = vadd.f32 0.0, %v329
    %331 = vmatmul.f32.gmra.mxu0 %v88
    %v332 = vpop.f32.mrf.mxu0
    %v333 = vadd.f32 0.0, %v332
    %334 = vmatmul.f32.gmra.mxu0 %v89
    %v335 = vpop.f32.mrf.mxu0
    %v336 = vadd.f32 0.0, %v335
    %337 = vmatmul.f32.gmra.mxu0 %v90
    %v338 = vpop.f32.mrf.mxu0
    %v339 = vadd.f32 0.0, %v338
    %340 = vmatmul.f32.gmra.mxu0 %v91
    %v341 = vpop.f32.mrf.mxu0
    %v342 = vadd.f32 0.0, %v341
    %343 = vmatmul.f32.gmra.mxu0 %v92
    %v344 = vpop.f32.mrf.mxu0
    %v345 = vadd.f32 0.0, %v344
    %346 = vmatmul.f32.gmra.mxu0 %v93
    %v347 = vpop.f32.mrf.mxu0
    %v348 = vadd.f32 0.0, %v347
    %349 = vmatmul.f32.gmra.mxu0 %v94
    %v350 = vpop.f32.mrf.mxu0
    %v351 = vadd.f32 0.0, %v350
    %352 = vdwg.mxu0
    %v353 = vld [vmem:[#allocation7] sm:$0x3]
    %v355 = vperm.slane %v353, 0
    %v356 = vperm.slane %v353, 1
    %v359 = vmul.f32 %v145, %v355
    %v360 = vmul.f32 %v258, %v356
    %v361 = vmul.f32 %v148, %v355
    %v362 = vmul.f32 %v261, %v356
    %v363 = vmul.f32 %v151, %v355
    %v364 = vmul.f32 %v264, %v356
    %v365 = vmul.f32 %v154, %v355
    %v366 = vmul.f32 %v267, %v356
    %v367 = vmul.f32 %v157, %v355
    %v368 = vmul.f32 %v270, %v356
    %v369 = vmul.f32 %v160, %v355
    %v370 = vmul.f32 %v273, %v356
    %v371 = vmul.f32 %v163, %v355
    %v372 = vmul.f32 %v276, %v356
    %v373 = vmul.f32 %v166, %v355
    %v374 = vmul.f32 %v279, %v356
    %v375 = vmul.f32 %v169, %v355
    %v376 = vmul.f32 %v282, %v356
    %v377 = vmul.f32 %v172, %v355
    %v378 = vmul.f32 %v285, %v356
    %v379 = vmul.f32 %v175, %v355
    %v380 = vmul.f32 %v288, %v356
    %v381 = vmul.f32 %v178, %v355
    %v382 = vmul.f32 %v291, %v356
    %v383 = vmul.f32 %v181, %v355
    %v384 = vmul.f32 %v294, %v356
    %v385 = vmul.f32 %v184, %v355
    %v386 = vmul.f32 %v297, %v356
    %v387 = vmul.f32 %v187, %v355
    %v388 = vmul.f32 %v300, %v356
    %v389 = vmul.f32 %v190, %v355
    %v390 = vmul.f32 %v303, %v356
    %v391 = vmul.f32 %v193, %v355
    %v392 = vmul.f32 %v306, %v356
    %v393 = vmul.f32 %v196, %v355
    %v394 = vmul.f32 %v309, %v356
    %v395 = vmul.f32 %v199, %v355
    %v396 = vmul.f32 %v312, %v356
    %v397 = vmul.f32 %v202, %v355
    %v398 = vmul.f32 %v315, %v356
    %v399 = vmul.f32 %v205, %v355
    %v400 = vmul.f32 %v318, %v356
    %v401 = vmul.f32 %v208, %v355
    %v402 = vmul.f32 %v321, %v356
    %v403 = vmul.f32 %v211, %v355
    %v404 = vmul.f32 %v324, %v356
    %v405 = vmul.f32 %v214, %v355
    %v406 = vmul.f32 %v327, %v356
    %v407 = vmul.f32 %v217, %v355
    %v408 = vmul.f32 %v330, %v356
    %v409 = vmul.f32 %v220, %v355
    %v410 = vmul.f32 %v333, %v356
    %v411 = vmul.f32 %v223, %v355
    %v412 = vmul.f32 %v336, %v356
    %v413 = vmul.f32 %v226, %v355
    %v414 = vmul.f32 %v339, %v356
    %v415 = vmul.f32 %v229, %v355
    %v416 = vmul.f32 %v342, %v356
    %v417 = vmul.f32 %v232, %v355
    %v418 = vmul.f32 %v345, %v356
    %v419 = vmul.f32 %v235, %v355
    %v420 = vmul.f32 %v348, %v356
    %v421 = vmul.f32 %v238, %v355
    %v422 = vmul.f32 %v351, %v356
    %v423 = vld [vmem:[%s3] sm:$0x3]
    %v425 = vperm.slane %v423, 0
    %v426 = vperm.slane %v423, 1
    %v429 = vadd.f32 %v359, %v425
    %v430 = vadd.f32 %v360, %v426
    %v431 = vadd.f32 %v361, %v425
    %v432 = vadd.f32 %v362, %v426
    %v433 = vadd.f32 %v363, %v425
    %v434 = vadd.f32 %v364, %v426
    %v435 = vadd.f32 %v365, %v425
    %v436 = vadd.f32 %v366, %v426
    %v437 = vadd.f32 %v367, %v425
    %v438 = vadd.f32 %v368, %v426
    %v439 = vadd.f32 %v369, %v425
    %v440 = vadd.f32 %v370, %v426
    %v441 = vadd.f32 %v371, %v425
    %v442 = vadd.f32 %v372, %v426
    %v443 = vadd.f32 %v373, %v425
    %v444 = vadd.f32 %v374, %v426
    %v445 = vadd.f32 %v375, %v425
    %v446 = vadd.f32 %v376, %v426
    %v447 = vadd.f32 %v377, %v425
    %v448 = vadd.f32 %v378, %v426
    %v449 = vadd.f32 %v379, %v425
    %v450 = vadd.f32 %v380, %v426
    %v451 = vadd.f32 %v381, %v425
    %v452 = vadd.f32 %v382, %v426
    %v453 = vadd.f32 %v383, %v425
    %v454 = vadd.f32 %v384, %v426
    %v455 = vadd.f32 %v385, %v425
    %v456 = vadd.f32 %v386, %v426
    %v457 = vadd.f32 %v387, %v425
    %v458 = vadd.f32 %v388, %v426
    %v459 = vadd.f32 %v389, %v425
    %v460 = vadd.f32 %v390, %v426
    %v461 = vadd.f32 %v391, %v425
    %v462 = vadd.f32 %v392, %v426
    %v463 = vadd.f32 %v393, %v425
    %v464 = vadd.f32 %v394, %v426
    %v465 = vadd.f32 %v395, %v425
    %v466 = vadd.f32 %v396, %v426
    %v467 = vadd.f32 %v397, %v425
    %v468 = vadd.f32 %v398, %v426
    %v469 = vadd.f32 %v399, %v425
    %v470 = vadd.f32 %v400, %v426
    %v471 = vadd.f32 %v401, %v425
    %v472 = vadd.f32 %v402, %v426
    %v473 = vadd.f32 %v403, %v425
    %v474 = vadd.f32 %v404, %v426
    %v475 = vadd.f32 %v405, %v425
    %v476 = vadd.f32 %v406, %v426
    %v477 = vadd.f32 %v407, %v425
    %v478 = vadd.f32 %v408, %v426
    %v479 = vadd.f32 %v409, %v425
    %v480 = vadd.f32 %v410, %v426
    %v481 = vadd.f32 %v411, %v425
    %v482 = vadd.f32 %v412, %v426
    %v483 = vadd.f32 %v413, %v425
    %v484 = vadd.f32 %v414, %v426
    %v485 = vadd.f32 %v415, %v425
    %v486 = vadd.f32 %v416, %v426
    %v487 = vadd.f32 %v417, %v425
    %v488 = vadd.f32 %v418, %v426
    %v489 = vadd.f32 %v419, %v425
    %v490 = vadd.f32 %v420, %v426
    %v491 = vadd.f32 %v421, %v425
    %v492 = vadd.f32 %v422, %v426
    %v493 = vmax.f32 %v429, 0.0
    %v494 = vmax.f32 %v430, 0.0
    %v495 = vmax.f32 %v431, 0.0
    %v496 = vmax.f32 %v432, 0.0
    %v497 = vmax.f32 %v433, 0.0
    %v498 = vmax.f32 %v434, 0.0
    %v499 = vmax.f32 %v435, 0.0
    %v500 = vmax.f32 %v436, 0.0
    %v501 = vmax.f32 %v437, 0.0
    %v502 = vmax.f32 %v438, 0.0
    %v503 = vmax.f32 %v439, 0.0
    %v504 = vmax.f32 %v440, 0.0
    %v505 = vmax.f32 %v441, 0.0
    %v506 = vmax.f32 %v442, 0.0
    %v507 = vmax.f32 %v443, 0.0
    %v508 = vmax.f32 %v444, 0.0
    %v509 = vmax.f32 %v445, 0.0
    %v510 = vmax.f32 %v446, 0.0
    %v511 = vmax.f32 %v447, 0.0
    %v512 = vmax.f32 %v448, 0.0
    %v513 = vmax.f32 %v449, 0.0
    %v514 = vmax.f32 %v450, 0.0
    %v515 = vmax.f32 %v451, 0.0
    %v516 = vmax.f32 %v452, 0.0
    %v517 = vmax.f32 %v453, 0.0
    %v518 = vmax.f32 %v454, 0.0
    %v519 = vmax.f32 %v455, 0.0
    %v520 = vmax.f32 %v456, 0.0
    %v521 = vmax.f32 %v457, 0.0
    %v522 = vmax.f32 %v458, 0.0
    %v523 = vmax.f32 %v459, 0.0
    %v524 = vmax.f32 %v460, 0.0
    %v525 = vmax.f32 %v461, 0.0
    %v526 = vmax.f32 %v462, 0.0
    %v527 = vmax.f32 %v463, 0.0
    %v528 = vmax.f32 %v464, 0.0
    %v529 = vmax.f32 %v465, 0.0
    %v530 = vmax.f32 %v466, 0.0
    %v531 = vmax.f32 %v467, 0.0
    %v532 = vmax.f32 %v468, 0.0
    %v533 = vmax.f32 %v469, 0.0
    %v534 = vmax.f32 %v470, 0.0
    %v535 = vmax.f32 %v471, 0.0
    %v536 = vmax.f32 %v472, 0.0
    %v537 = vmax.f32 %v473, 0.0
    %v538 = vmax.f32 %v474, 0.0
    %v539 = vmax.f32 %v475, 0.0
    %v540 = vmax.f32 %v476, 0.0
    %v541 = vmax.f32 %v477, 0.0
    %v542 = vmax.f32 %v478, 0.0
    %v543 = vmax.f32 %v479, 0.0
    %v544 = vmax.f32 %v480, 0.0
    %v545 = vmax.f32 %v481, 0.0
    %v546 = vmax.f32 %v482, 0.0
    %v547 = vmax.f32 %v483, 0.0
    %v548 = vmax.f32 %v484, 0.0
    %v549 = vmax.f32 %v485, 0.0
    %v550 = vmax.f32 %v486, 0.0
    %v551 = vmax.f32 %v487, 0.0
    %v552 = vmax.f32 %v488, 0.0
    %v553 = vmax.f32 %v489, 0.0
    %v554 = vmax.f32 %v490, 0.0
    %v555 = vmax.f32 %v491, 0.0
    %v556 = vmax.f32 %v492, 0.0
    %557 = vst [vmem:[#allocation8] sm:$0xff] %v493
    %558 = vst [vmem:[#allocation8 + $0x8] sm:$0xff] %v494
    %559 = vst [vmem:[#allocation8 + $0x10] sm:$0xff] %v495
    %560 = vst [vmem:[#allocation8 + $0x18] sm:$0xff] %v496
    %561 = vst [vmem:[#allocation8 + $0x20] sm:$0xff] %v497
    %562 = vst [vmem:[#allocation8 + $0x28] sm:$0xff] %v498
    %563 = vst [vmem:[#allocation8 + $0x30] sm:$0xff] %v499
    %564 = vst [vmem:[#allocation8 + $0x38] sm:$0xff] %v500
    %565 = vst [vmem:[#allocation8 + $0x40] sm:$0xff] %v501
    %566 = vst [vmem:[#allocation8 + $0x48] sm:$0xff] %v502
    %567 = vst [vmem:[#allocation8 + $0x50] sm:$0xff] %v503
    %568 = vst [vmem:[#allocation8 + $0x58] sm:$0xff] %v504
    %569 = vst [vmem:[#allocation8 + $0x60] sm:$0xff] %v505
    %570 = vst [vmem:[#allocation8 + $0x68] sm:$0xff] %v506
    %571 = vst [vmem:[#allocation8 + $0x70] sm:$0xff] %v507
    %572 = vst [vmem:[#allocation8 + $0x78] sm:$0xff] %v508
    %573 = vst [vmem:[#allocation8 + $0x80] sm:$0xff] %v509
    %574 = vst [vmem:[#allocation8 + $0x88] sm:$0xff] %v510
    %575 = vst [vmem:[#allocation8 + $0x90] sm:$0xff] %v511
    %576 = vst [vmem:[#allocation8 + $0x98] sm:$0xff] %v512
    %577 = vst [vmem:[#allocation8 + $0xa0] sm:$0xff] %v513
    %578 = vst [vmem:[#allocation8 + $0xa8] sm:$0xff] %v514
    %579 = vst [vmem:[#allocation8 + $0xb0] sm:$0xff] %v515
    %580 = vst [vmem:[#allocation8 + $0xb8] sm:$0xff] %v516
    %581 = vst [vmem:[#allocation8 + $0xc0] sm:$0xff] %v517
    %582 = vst [vmem:[#allocation8 + $0xc8] sm:$0xff] %v518
    %583 = vst [vmem:[#allocation8 + $0xd0] sm:$0xff] %v519
    %584 = vst [vmem:[#allocation8 + $0xd8] sm:$0xff] %v520
    %585 = vst [vmem:[#allocation8 + $0xe0] sm:$0xff] %v521
    %586 = vst [vmem:[#allocation8 + $0xe8] sm:$0xff] %v522
    %587 = vst [vmem:[#allocation8 + $0xf0] sm:$0xff] %v523
    %588 = vst [vmem:[#allocation8 + $0xf8] sm:$0xff] %v524
    %589 = vst [vmem:[#allocation8 + $0x100] sm:$0xff] %v525
    %590 = vst [vmem:[#allocation8 + $0x108] sm:$0xff] %v526
    %591 = vst [vmem:[#allocation8 + $0x110] sm:$0xff] %v527
    %592 = vst [vmem:[#allocation8 + $0x118] sm:$0xff] %v528
    %593 = vst [vmem:[#allocation8 + $0x120] sm:$0xff] %v529
    %594 = vst [vmem:[#allocation8 + $0x128] sm:$0xff] %v530
    %595 = vst [vmem:[#allocation8 + $0x130] sm:$0xff] %v531
    %596 = vst [vmem:[#allocation8 + $0x138] sm:$0xff] %v532
    %597 = vst [vmem:[#allocation8 + $0x140] sm:$0xff] %v533
    %598 = vst [vmem:[#allocation8 + $0x148] sm:$0xff] %v534
    %599 = vst [vmem:[#allocation8 + $0x150] sm:$0xff] %v535
    %600 = vst [vmem:[#allocation8 + $0x158] sm:$0xff] %v536
    %601 = vst [vmem:[#allocation8 + $0x160] sm:$0xff] %v537
    %602 = vst [vmem:[#allocation8 + $0x168] sm:$0xff] %v538
    %603 = vst [vmem:[#allocation8 + $0x170] sm:$0xff] %v539
    %604 = vst [vmem:[#allocation8 + $0x178] sm:$0xff] %v540
    %605 = vst [vmem:[#allocation8 + $0x180] sm:$0xff] %v541
    %606 = vst [vmem:[#allocation8 + $0x188] sm:$0xff] %v542
    %607 = vst [vmem:[#allocation8 + $0x190] sm:$0xff] %v543
    %608 = vst [vmem:[#allocation8 + $0x198] sm:$0xff] %v544
    %609 = vst [vmem:[#allocation8 + $0x1a0] sm:$0xff] %v545
    %610 = vst [vmem:[#allocation8 + $0x1a8] sm:$0xff] %v546
    %611 = vst [vmem:[#allocation8 + $0x1b0] sm:$0xff] %v547
    %612 = vst [vmem:[#allocation8 + $0x1b8] sm:$0xff] %v548
    %613 = vst [vmem:[#allocation8 + $0x1c0] sm:$0xff] %v549
    %614 = vst [vmem:[#allocation8 + $0x1c8] sm:$0xff] %v550
    %615 = vst [vmem:[#allocation8 + $0x1d0] sm:$0xff] %v551
    %616 = vst [vmem:[#allocation8 + $0x1d8] sm:$0xff] %v552
    %617 = vst [vmem:[#allocation8 + $0x1e0] sm:$0xff] %v553
    %618 = vst [vmem:[#allocation8 + $0x1e8] sm:$0xff] %v554
    %619 = vst [vmem:[#allocation8 + $0x1f0] sm:$0xff] %v555
    %620 = vst [vmem:[#allocation8 + $0x1f8] sm:$0xff] %v556
    // Predicated region
    $region30: #{tpu_custom_call.1} parent=1 // pred_check
      _
    $region31: #{tpu_custom_call.1} parent=1 // pred_check_branch
      %622 = sbr.rel (0) target = $region33
    $region32: #{tpu_custom_call.1} parent=1 // pred_region
      %624 = vsyncadd [#allocation4], 0
      %s625 = sshll.u32 [#allocation8], 4
      %s626 = int_to_ptr.vmem [resolvable:$true] %s625
      %s627 = sshll.u32 %s4, 4
      %s628 = int_to_ptr.hbm [resolvable:$true] %s627
      %633 = dma.vmem_to_hbm [thread:$0]  %s626, 8192, %s628, [#allocation4], 256, 256, 16
    $region33: #{tpu_custom_call.1} parent=1 // pred_fallthru
      _
    // Predicated region
    $region34: #{tpu_custom_call.1} parent=1 // pred_check
      _
    $region35: #{tpu_custom_call.1} parent=1 // pred_check_branch
      %635 = sbr.rel (0) target = $region37
    $region36: #{tpu_custom_call.1} parent=1 // pred_region
      %637 = dma.done [#allocation4], 8192
    $region37: #{tpu_custom_call.1} parent=1 // pred_fallthru
      _
    %638 = vsyncpa [#allocation3], 1
    %639 = vsyncpa [#allocation6], 1
    %640 = vsyncpa [#allocation4], 1

</llo_original>
